<compile_context>
chip_gen: v6e
topology: v6e:2x2x1
jax: 0.10.0
libtpu: 0.0.40
codegen_flags: <defaults>
</compile_context>

<pallas_src>
import numpy as np
import jax
import jax.numpy as jnp
from jax import lax
from jax.experimental import pallas as pl
from jax.experimental.pallas import tpu as pltpu

NEG_INF = -1.0e30
BB = 8          # samples per recursion block (= one f32 sublane tile)
LANES = 128


def _ceil_to(x, m):
    return ((x + m - 1) // m) * m


# -----------------------------------------------------------------------------
# Kernel A: fused log-softmax + extended-label gather (one sample, one T-chunk)
# -----------------------------------------------------------------------------
def _gather_kernel(ext_ref, logits_ref, g_ref, onehot_ref):
    c = pl.program_id(1)

    @pl.when(c == 0)
    def _():
        v, s_pad = onehot_ref.shape
        iota_v = lax.broadcasted_iota(jnp.int32, (v, s_pad), 0)
        onehot_ref[...] = (iota_v == ext_ref[0]).astype(jnp.float32)

    x = logits_ref[0].astype(jnp.float32)                       # (TC, V)
    m = jnp.max(x, axis=-1, keepdims=True)
    lse = m + jnp.log(jnp.sum(jnp.exp(x - m), axis=-1, keepdims=True))   # (TC, 1)
    # gather of log-probs: dot with one-hot selects logits[t, ext[s]], then
    # subtract the row log-sum-exp (no full (T, V) log-softmax is materialized)
    g_ref[0] = jnp.dot(x, onehot_ref[...],
                       preferred_element_type=jnp.float32) - lse          # (TC, s_pad)


# -----------------------------------------------------------------------------
# Kernel B: batched CTC alpha recursion (BB samples per block, time-chunked)
# -----------------------------------------------------------------------------
def _alpha_kernel(tmax_ref, lens_ref, ext_ref, g_ref, cost_ref, alpha_ref):
    b = pl.program_id(0)
    c = pl.program_id(1)
    n_tc = pl.num_programs(1)
    tc = g_ref.shape[1]

    lens = lens_ref[0]                       # (BB, LANES) int32
    in_len = lens[:, 0:1]                    # (BB, 1)
    lab_len = lens[:, 1:2]                   # (BB, 1)
    s_len = 2 * lab_len + 1                  # (BB, 1)

    ext = ext_ref[0]                         # (BB, s_pad) int32
    s_pad = ext.shape[1]
    s_idx = lax.broadcasted_iota(jnp.int32, (BB, s_pad), 1)
    valid_s = s_idx < s_len
    skip = (s_idx >= 2) & (ext != 0) & (ext != pltpu.roll(ext, shift=2, axis=1))
    m1 = s_idx >= 1

    @pl.when(c == 0)
    def _():
        # "virtual" pre-t=0 state: applying one recursion step with g[:, 0]
        # reproduces the standard CTC alpha_0 initialisation exactly.
        alpha_ref[...] = jnp.where(s_idx == 0, 0.0, NEG_INF)

    t0 = c * tc
    hi = jnp.clip(tmax_ref[b] - t0, 0, tc)   # dynamic trip count (skip padding)

    def body(j, alpha):
        g_t = g_ref[0, j]                                        # (BB, s_pad)
        a1 = jnp.where(m1, pltpu.roll(alpha, shift=1, axis=1), NEG_INF)
        a2 = jnp.where(skip, pltpu.roll(alpha, shift=2, axis=1), NEG_INF)
        mx = jnp.maximum(jnp.maximum(alpha, a1), a2)
        acc = mx + jnp.log(jnp.exp(alpha - mx) + jnp.exp(a1 - mx) + jnp.exp(a2 - mx))
        new = jnp.where(valid_s, acc + g_t, NEG_INF)
        return jnp.where(t0 + j < in_len, new, alpha)            # per-sample gate

    alpha_ref[...] = lax.fori_loop(0, hi, body, alpha_ref[...])

    @pl.when(c == n_tc - 1)
    def _():
        alpha = alpha_ref[...]
        end_mask = ((s_idx == s_len - 1) | (s_idx == s_len - 2)) & valid_s
        fin = jnp.where(end_mask, alpha, NEG_INF)
        mf = jnp.max(fin, axis=-1, keepdims=True)
        ll = mf + jnp.log(jnp.sum(jnp.exp(fin - mf), axis=-1, keepdims=True))  # (BB,1)
        cost_ref[0] = jnp.broadcast_to(-ll, cost_ref.shape[1:])


# -----------------------------------------------------------------------------
# Wrapper: forward of WARP_CTC_LOSS (returns -(sum of per-sample NLL) / N, (1,))
# -----------------------------------------------------------------------------
def warp_ctc_loss(logits, labels, input_lengths, label_lengths, size_average=True):
    N, T, V = logits.shape

    in_lens = np.minimum(np.asarray(input_lengths, np.int64), T)
    lab_lens = np.asarray(label_lengths, np.int64)
    labels_np = np.asarray(labels, np.int64)

    n_blocks = -(-N // BB)
    N_pad = n_blocks * BB

    l_max = int(lab_lens.max()) if N > 0 else 0
    s_pad = _ceil_to(max(2 * l_max + 1, 1), LANES)

    # time chunk: multiple of 8, bounded so a (TC, V) f32 chunk stays ~<=2.5 MB
    tc_cap = max(8, ((2_500_000 // max(4 * V, 1)) // 8) * 8)
    TC = max(8, min(_ceil_to(T, 8), 256, tc_cap))
    T_pad = _ceil_to(T, TC)
    n_tc = T_pad // TC

    # small host-side label prep: extended labels (blank=0 interleaved) + lengths
    # TODO(synk): this needs concrete labels/lengths (not end-to-end jittable).
    ext = np.zeros((N_pad, s_pad), np.int32)
    lens = np.zeros((n_blocks, BB, LANES), np.int32)
    offsets = np.concatenate([[0], np.cumsum(lab_lens)]).astype(np.int64)
    for i in range(N):
        L = int(lab_lens[i])
        ext[i, 1:2 * L:2] = labels_np[offsets[i]:offsets[i] + L]
        lens[i // BB, i % BB, 0] = int(in_lens[i])
        lens[i // BB, i % BB, 1] = L
    tmax = lens[:, :, 0].max(axis=1).astype(np.int32)            # (n_blocks,)

    ext_a = jnp.asarray(ext).reshape(N_pad, 1, s_pad)
    ext_b = jnp.asarray(ext).reshape(n_blocks, BB, s_pad)
    lens_d = jnp.asarray(lens)
    tmax_d = jnp.asarray(tmax)

    # ---- kernel A: fused log-softmax + label gather -> g_sm (N_pad, T_pad, s_pad)
    est_a = (2 * TC * V * 4 + V * s_pad * 4 + 2 * TC * s_pad * 4
             + 4 * s_pad * 4 + (1 << 20))
    vmem_a = min(56 << 20, max(32 << 20, int(est_a * 1.3)))
    # TODO(synk): for very large vocabularies (V*s_pad*4 >> VMEM) the one-hot /
    # dot would additionally need V-chunking with an online lse accumulation.
    g_sm = pl.pallas_call(
        _gather_kernel,
        out_shape=jax.ShapeDtypeStruct((N_pad, T_pad, s_pad), jnp.float32),
        grid_spec=pltpu.PrefetchScalarGridSpec(
            num_scalar_prefetch=0,
            grid=(N_pad, n_tc),
            in_specs=[
                pl.BlockSpec((1, 1, s_pad), lambda n, c: (n, 0, 0)),
                # clamp padded batch rows onto the last real sample (no host pad)
                pl.BlockSpec((1, TC, V), lambda n, c: (jnp.minimum(n, N - 1), c, 0)),
            ],
            out_specs=pl.BlockSpec((1, TC, s_pad), lambda n, c: (n, c, 0)),
            scratch_shapes=[pltpu.VMEM((V, s_pad), jnp.float32)],
        ),
        compiler_params=pltpu.CompilerParams(
            dimension_semantics=("parallel", "arbitrary"),
            vmem_limit_bytes=vmem_a),
    )(ext_a, logits)

    # layout plumbing (plain XLA): sample-major -> time-major within each block
    g_tm = g_sm.reshape(n_blocks, BB, T_pad, s_pad).transpose(0, 2, 1, 3)

    # ---- kernel B: batched alpha recursion -> per-sample NLL
    costs = pl.pallas_call(
        _alpha_kernel,
        out_shape=jax.ShapeDtypeStruct((n_blocks, BB, LANES), jnp.float32),
        grid_spec=pltpu.PrefetchScalarGridSpec(
            num_scalar_prefetch=1,
            grid=(n_blocks, n_tc),
            in_specs=[
                pl.BlockSpec((1, BB, LANES), lambda b, c, tm: (b, 0, 0)),
                pl.BlockSpec((1, BB, s_pad), lambda b, c, tm: (b, 0, 0)),
                pl.BlockSpec((1, TC, BB, s_pad), lambda b, c, tm: (b, c, 0, 0)),
            ],
            out_specs=pl.BlockSpec((1, BB, LANES), lambda b, c, tm: (b, 0, 0)),
            scratch_shapes=[pltpu.VMEM((BB, s_pad), jnp.float32)],
        ),
        compiler_params=pltpu.CompilerParams(
            dimension_semantics=("parallel", "arbitrary")),
    )(tmax_d, lens_d, ext_b, g_tm)

    per_sample_nll = costs[:, :, 0].reshape(N_pad)[:N]   # == warp-ctc costs_ctc
    total = -jnp.sum(per_sample_nll)                     # costs_all.sum()
    if size_average:
        total = total / N
    return jnp.reshape(total.astype(jnp.float32), (1,))
    # TODO(synk): backward (ctx.grads from warp-ctc) not implemented; forward only.


# ----------------------------- pure-numpy reference ---------------------------
def _np_log_softmax(x):
    m = x.max(axis=-1, keepdims=True)
    return x - (m + np.log(np.exp(x - m).sum(axis=-1, keepdims=True)))


def _ctc_ref(logits, labels, in_lens, lab_lens, size_average=True):
    N = logits.shape[0]
    costs = np.zeros(N, np.float64)
    off = 0
    for b in range(N):
        L = int(lab_lens[b]); Tb = int(in_lens[b])
        lab = labels[off:off + L]; off += L
        logp = _np_log_softmax(logits[b].astype(np.float64))
        ext = [0]
        for ch in lab:
            ext += [int(ch), 0]
        S = len(ext)
        alpha = np.full(S, -np.inf)
        alpha[0] = logp[0, ext[0]]
        if S > 1:
            alpha[1] = logp[0, ext[1]]
        for t in range(1, Tb):
            new = np.full(S, -np.inf)
            for s in range(S):
                v = alpha[s]
                if s >= 1:
                    v = np.logaddexp(v, alpha[s - 1])
                if s >= 2 and ext[s] != 0 and ext[s] != ext[s - 2]:
                    v = np.logaddexp(v, alpha[s - 2])
                new[s] = v + logp[t, ext[s]]
            alpha = new
        ll = alpha[S - 1] if S < 2 else np.logaddexp(alpha[S - 1], alpha[S - 2])
        costs[b] = -ll
    total = -costs.sum()
    if size_average:
        total = total / N
    return np.array([total], np.float32)


if __name__ == "__main__":
    key = jax.random.PRNGKey(0)
    N, T, V = 3, 16, 20
    label_lengths = np.array([3, 5, 4], np.int32)
    input_lengths = np.array([16, 12, 14], np.int32)

    k1, k2 = jax.random.split(key)
    logits = jax.random.normal(k1, (N, T, V), jnp.float32)
    labels = jax.random.randint(k2, (int(label_lengths.sum()),), 1, V, jnp.int32)

    out = warp_ctc_loss(logits, labels, input_lengths, label_lengths, size_average=True)
    out = jax.block_until_ready(out)

    ref = _ctc_ref(np.asarray(logits), np.asarray(labels), input_lengths,
                   label_lengths, True)
    assert np.allclose(np.asarray(out), ref, rtol=1e-3, atol=1e-3), (np.asarray(out), ref)
    print("KERNEL_OK")
</pallas_src>

<mosaic_0001>
module attributes {stable_mosaic.version = 11 : i64} {
  func.func @_gather_kernel(%arg0: i32, %arg1: i32, %arg2: memref<1x1x128xi32, #tpu.memory_space<vmem>>, %arg3: memref<1x16x20xf32, #tpu.memory_space<vmem>>, %arg4: memref<1x16x128xf32, #tpu.memory_space<vmem>>, %arg5: memref<20x128xf32, #tpu.memory_space<vmem>>) attributes {dimension_semantics = [#tpu.dimension_semantics<parallel>, #tpu.dimension_semantics<arbitrary>], iteration_bounds = array<i64: 8, 1>, scalar_prefetch = 0 : i64, scratch_operands = 1 : i64, tpu.core_type = #tpu.core_type<tc>, window_params = [{transform_indices = @transform_0, window_bounds = array<i64: 1, 1, 128>}, {transform_indices = @transform_1, window_bounds = array<i64: 1, 16, 20>}, {transform_indices = @transform_2, window_bounds = array<i64: 1, 16, 128>}]} {
    %c0_i32 = arith.constant 0 : i32
    %0 = arith.cmpi eq, %arg1, %c0_i32 : i32
    %1 = arith.extui %0 : i1 to i32
    %c0_i32_0 = arith.constant 0 : i32
    %2 = arith.cmpi ne, %1, %c0_i32_0 : i32
    scf.if %2 {
      %21 = tpu.iota {dimensions = array<i32: 0>} : vector<20x128xi32>
      %c0_10 = arith.constant 0 : index
      %c0_11 = arith.constant 0 : index
      %c0_12 = arith.constant 0 : index
      %22 = vector.load %arg2[%c0_10, %c0_11, %c0_12] : memref<1x1x128xi32, #tpu.memory_space<vmem>>, vector<1x1x128xi32>
      %23 = vector.shape_cast %22 : vector<1x1x128xi32> to vector<1x128xi32>
      %24 = vector.broadcast %23 : vector<1x128xi32> to vector<20x128xi32>
      %25 = arith.cmpi eq, %21, %24 : vector<20x128xi32>
      %26 = arith.extui %25 : vector<20x128xi1> to vector<20x128xi32>
      %27 = arith.sitofp %26 : vector<20x128xi32> to vector<20x128xf32>
      %c0_13 = arith.constant 0 : index
      %c0_14 = arith.constant 0 : index
      %28 = vector.load %arg5[%c0_13, %c0_14] : memref<20x128xf32, #tpu.memory_space<vmem>>, vector<20x128xf32>
      tpu.vector_store %arg5[%c0_13, %c0_14], %27 {strides = array<i32>} : memref<20x128xf32, #tpu.memory_space<vmem>>, vector<20x128xf32>,
    } else {
    }
    %c0 = arith.constant 0 : index
    %c0_1 = arith.constant 0 : index
    %c0_2 = arith.constant 0 : index
    %3 = vector.load %arg3[%c0, %c0_1, %c0_2] : memref<1x16x20xf32, #tpu.memory_space<vmem>>, vector<1x16x20xf32>
    %4 = vector.shape_cast %3 : vector<1x16x20xf32> to vector<16x20xf32>
    %cst = arith.constant dense<0xFF800000> : vector<16xf32>
    %5 = vector.multi_reduction <maximumf>, %4, %cst [1] : vector<16x20xf32> to vector<16xf32>
    %6 = vector.shape_cast %5 : vector<16xf32> to vector<16x1xf32>
    %7 = vector.broadcast %6 : vector<16x1xf32> to vector<16x20xf32>
    %8 = arith.subf %4, %7 : vector<16x20xf32>
    %9 = math.exp %8 : vector<16x20xf32>
    %cst_3 = arith.constant dense<0.000000e+00> : vector<16xf32>
    %10 = vector.multi_reduction <add>, %9, %cst_3 [1] : vector<16x20xf32> to vector<16xf32>
    %11 = vector.shape_cast %10 : vector<16xf32> to vector<16x1xf32>
    %12 = math.log %11 : vector<16x1xf32>
    %13 = arith.addf %6, %12 : vector<16x1xf32>
    %c0_4 = arith.constant 0 : index
    %c0_5 = arith.constant 0 : index
    %14 = vector.load %arg5[%c0_4, %c0_5] : memref<20x128xf32, #tpu.memory_space<vmem>>, vector<20x128xf32>
    %cst_6 = arith.constant dense<0.000000e+00> : vector<16x128xf32>
    %15 = tpu.matmul %4, %14, %cst_6 {dimension_numbers = #tpu.dot_dimension_numbers<[1], [0], [0], [1], [0, 0, 1, 1], [], []>} : vector<16x20xf32>, vector<20x128xf32>, vector<16x128xf32> -> vector<16x128xf32>
    %16 = vector.broadcast %13 : vector<16x1xf32> to vector<16x128xf32>
    %17 = arith.subf %15, %16 : vector<16x128xf32>
    %c0_7 = arith.constant 0 : index
    %c0_8 = arith.constant 0 : index
    %c0_9 = arith.constant 0 : index
    %18 = vector.load %arg4[%c0_7, %c0_8, %c0_9] : memref<1x16x128xf32, #tpu.memory_space<vmem>>, vector<1x16x128xf32>
    %19 = vector.shape_cast %18 : vector<1x16x128xf32> to vector<16x128xf32>
    %20 = vector.shape_cast %17 : vector<16x128xf32> to vector<1x16x128xf32>
    tpu.vector_store %arg4[%c0_7, %c0_8, %c0_9], %20 {strides = array<i32>} : memref<1x16x128xf32, #tpu.memory_space<vmem>>, vector<1x16x128xf32>,
    return
  }
  func.func @transform_0(%arg0: i32, %arg1: i32) -> (i32, i32, i32) {
    %c0_i32 = arith.constant 0 : i32
    %c0_i32_0 = arith.constant 0 : i32
    %c0_i32_1 = arith.constant 0 : i32
    return %arg0, %c0_i32, %c0_i32_0 : i32, i32, i32
  }
  func.func @transform_1(%arg0: i32, %arg1: i32) -> (i32, i32, i32) {
    %c2_i32 = arith.constant 2 : i32
    %0 = arith.minsi %arg0, %c2_i32 : i32
    %c0_i32 = arith.constant 0 : i32
    %c0_i32_0 = arith.constant 0 : i32
    return %0, %arg1, %c0_i32 : i32, i32, i32
  }
  func.func @transform_2(%arg0: i32, %arg1: i32) -> (i32, i32, i32) {
    %c0_i32 = arith.constant 0 : i32
    %c0_i32_0 = arith.constant 0 : i32
    return %arg0, %arg1, %c0_i32 : i32, i32, i32
  }
}

</mosaic_0001>

<llo_original>
// kernel: tpu_custom_call.1
$region0: #{tpu_custom_call.1}
  #allocation0 [shape = 'u32[]', space=smem, size = 0x4, offset = 0x4, fixed_abs, tag = 'smem constant byte address 0x4 - core index']
  #allocation1 [shape = 'u32[144,128]{1,0:T(1,128)}', space=vmem, size = 0x12000, scoped, tag = 'internal scratch']
  #allocation2 [shape = 'f32[20,128]{1,0:T(8,128)}', space=vmem, size = 0x3000, scoped, tag = 'scratch operand']
  %s0 = inlined_call_operand.hbm [shape: s32[8,1,128], index: 0, kind: input, shape index: {}]
  %s1 = inlined_call_operand.hbm [shape: f32[3,16,20], index: 1, kind: input, shape index: {}]
  %s2 = inlined_call_operand.hbm [shape: f32[8,16,128], index: 2, kind: output, shape index: {}]
  %s3 = sld [smem:[#allocation0]]
  $region53: #{tpu_custom_call.1} parent=0
    _
  %s5 = ssub.s32 1, %s3
  %s6 = scalar_select 0, %s5, %s3
  $region1: #{tpu_custom_call.1} parent=0
    #allocation3 [shape = 'u8[1024]{0}', space=vmem, size = 0x400, scoped, tag = 'input window, operand 0']
    #allocation4 [shape = 's32[2]{0}', space=sflag, size = 0x8, scoped, tag = 'scoped memory for tpu_custom_call.1']
    #allocation5 [shape = 's32[2]{0}', space=sflag, size = 0x8, scoped, tag = 'scoped memory for tpu_custom_call.1']
    #allocation6 [shape = 'u8[16384]{0}', space=vmem, size = 0x4000, scoped, tag = 'input window, operand 1']
    #allocation7 [shape = 's32[2]{0}', space=sflag, size = 0x8, scoped, tag = 'scoped memory for tpu_custom_call.1']
    #allocation8 [shape = 'u8[16384]{0}', space=vmem, size = 0x4000, scoped, tag = 'output window, operand 0']
    %7 = vsyncpa [#allocation4], 0
    %s8 = scalar_lea.sflag [#allocation4], 1
    %9 = vsyncpa %s8, 0
    %10 = vsyncpa [#allocation7], 0
    %s11 = scalar_lea.sflag [#allocation7], 1
    %12 = vsyncpa %s11, 0
    %13 = vsyncpa [#allocation5], 0
    %s14 = scalar_lea.sflag [#allocation5], 1
    %15 = vsyncpa %s14, 0
    loop: start=0, step=1, limit=10
    $region2: #{tpu_custom_call.1} parent=1 // loop_pre_header
      _
    $region3: #{tpu_custom_call.1} parent=1 // loop_header
      %s17 = sphi 0, %s21
      %p18 = scmp.ge.s32.totalorder %s17, 10
      %s24 = sphi 0, %s36
      %s25 = sphi 0, %s32
      %s26 = sphi 0, %s24
      %s27 = sphi 0, %s25
      %s28 = sphi 0, %s26
      %s29 = sphi 0, %s27
      %s39 = sphi 0, %s41
      %s42 = sphi 0, %s39
      %s43 = sphi 0, %s42
      %s59 = sphi 0, %s43
      %s71 = sphi 0, %s73
      %s74 = sphi 0, %s71
      %s75 = sphi 0, %s74
      %s91 = sphi 0, %s75
      %s99 = sphi 0, %s101
      %s102 = sphi 0, %s99
      %s103 = sphi 0, %s102
      %s119 = sphi 0, %s103
    $region4: #{tpu_custom_call.1} parent=1 // loop_header_branch
      %20 = sbr.rel (%p18) target = $region8
    $region5: #{tpu_custom_call.1} parent=1 // loop_body
      %s22 = ssub.s32 %s17, 1
      %s23 = ssub.s32 %s17, 2
      %s30 = sadd.s32 1, %s25
      %p31 = scmp.ge.s32.totalorder %s30, 1
      %s32 = scalar_select %p31, 0, %s30
      %s33 = sadd.s32 1, %s24
      %s34 = scalar_select %p31, %s33, %s24
      %p35 = scmp.ge.s32.totalorder %s34, 8
      %s36 = scalar_select %p35, 0, %s34
      %s37 = ssub.s32 %s24, %s36
      %p38 = scmp.eq.s32.totalorder %s37, 0
      %s40 = sadd.s32 %s39, 1
      %s41 = scalar_select %p38, %s39, %s40
      %p44 = pneg %p38
      %p45 = scmp.eq.s32.totalorder %s17, 7
      %p46 = por %p44, %p45
      %p47 = scmp.ne.s32.totalorder %s39, %s42
      %p48 = scmp.eq.s32.totalorder %s17, 0
      %p49 = por %p47, %p48
      %p50 = scmp.ne.s32.totalorder %s39, %s42
      %p51 = scmp.eq.s32.totalorder %s22, 7
      %p52 = por %p50, %p51
      %p53 = scmp.ne.s32.totalorder %s42, %s43
      %p54 = scmp.eq.s32.totalorder %s22, 0
      %p55 = por %p53, %p54
      %p56 = scmp.ne.s32.totalorder %s42, %s43
      %p57 = scmp.eq.s32.totalorder %s23, 7
      %p58 = por %p56, %p57
      %p60 = scmp.ne.s32.totalorder %s43, %s59
      %p61 = scmp.eq.s32.totalorder %s23, 0
      %p62 = por %p60, %p61
      %p63 = scmp.lt.s32.totalorder %s24, 2
      %s64 = scalar_select %p63, %s24, 2
      %p65 = scmp.lt.s32.totalorder %s36, 2
      %s66 = scalar_select %p65, %s36, 2
      %s67 = ssub.s32 %s64, %s66
      %s68 = ssub.s32 %s25, %s32
      %s69 = sor.u32 %s67, %s68
      %p70 = scmp.eq.s32.totalorder %s69, 0
      %s72 = sadd.s32 %s71, 1
      %s73 = scalar_select %p70, %s71, %s72
      %p76 = pneg %p70
      %p77 = scmp.eq.s32.totalorder %s17, 7
      %p78 = por %p76, %p77
      %p79 = scmp.ne.s32.totalorder %s71, %s74
      %p80 = scmp.eq.s32.totalorder %s17, 0
      %p81 = por %p79, %p80
      %p82 = scmp.ne.s32.totalorder %s71, %s74
      %p83 = scmp.eq.s32.totalorder %s22, 7
      %p84 = por %p82, %p83
      %p85 = scmp.ne.s32.totalorder %s74, %s75
      %p86 = scmp.eq.s32.totalorder %s22, 0
      %p87 = por %p85, %p86
      %p88 = scmp.ne.s32.totalorder %s74, %s75
      %p89 = scmp.eq.s32.totalorder %s23, 7
      %p90 = por %p88, %p89
      %p92 = scmp.ne.s32.totalorder %s75, %s91
      %p93 = scmp.eq.s32.totalorder %s23, 0
      %p94 = por %p92, %p93
      %s95 = ssub.s32 %s24, %s36
      %s96 = ssub.s32 %s25, %s32
      %s97 = sor.u32 %s95, %s96
      %p98 = scmp.eq.s32.totalorder %s97, 0
      %s100 = sadd.s32 %s99, 1
      %s101 = scalar_select %p98, %s99, %s100
      %p104 = pneg %p98
      %p105 = scmp.eq.s32.totalorder %s17, 7
      %p106 = por %p104, %p105
      %p107 = scmp.ne.s32.totalorder %s99, %s102
      %p108 = scmp.eq.s32.totalorder %s17, 0
      %p109 = por %p107, %p108
      %p110 = scmp.ne.s32.totalorder %s99, %s102
      %p111 = scmp.eq.s32.totalorder %s22, 7
      %p112 = por %p110, %p111
      %p113 = scmp.ne.s32.totalorder %s102, %s103
      %p114 = scmp.eq.s32.totalorder %s22, 0
      %p115 = por %p113, %p114
      %p116 = scmp.ne.s32.totalorder %s102, %s103
      %p117 = scmp.eq.s32.totalorder %s23, 7
      %p118 = por %p116, %p117
      %p120 = scmp.ne.s32.totalorder %s103, %s119
      %p121 = scmp.eq.s32.totalorder %s23, 0
      %p122 = por %p120, %p121
      %p123 = scmp.le.s32.totalorder 1, %s17
      %p124 = scmp.lt.s32.totalorder %s17, 9
      %p125 = pnand %p123, %p124
      %p126 = pneg %p125
      // Predicated region
      $region9: #{tpu_custom_call.1} parent=5 // pred_check
        _
      $region10: #{tpu_custom_call.1} parent=5 // pred_check_branch
        %128 = sbr.rel (%p125) target = $region12
      $region11: #{tpu_custom_call.1} parent=5 // pred_region
        %s129 = ssub.s32 %s17, 1
      $region12: #{tpu_custom_call.1} parent=5 // pred_fallthru
        _
      %p130 = scmp.lt.s32.totalorder %s17, 8
      // Predicated region
      $region13: #{tpu_custom_call.1} parent=5 // pred_check
        %p131 = pneg %p130
      $region14: #{tpu_custom_call.1} parent=5 // pred_check_branch
        %133 = sbr.rel (%p131) target = $region16
      $region15: #{tpu_custom_call.1} parent=5 // pred_region
        // Predicated region
        $region17: #{tpu_custom_call.1} parent=15 // pred_check
          %p134 = pneg %p49
        $region18: #{tpu_custom_call.1} parent=15 // pred_check_branch
          %136 = sbr.rel (%p134) target = $region20
        $region19: #{tpu_custom_call.1} parent=15 // pred_region
          %s137 = sand.u32 %s39, 1
          %s138 = scalar_lea.sflag [#allocation4], %s137
          %s139 = sand.u32 %s39, 1
          %s140 = scalar_lea.vmem [#allocation3], %s139
          %s142 = ssub.s32 16, 16
          %143 = vsyncadd %s138, %s142
          %s144 = smul.addr %s24, 16
          %s145 = scalar_lea.hbm %s0, %s144
          %s147 = sshll.u32 %s140, 4
          %s148 = int_to_ptr.vmem [resolvable:$true] %s147
          %150 = dma.hbm_to_vmem [thread:$0]  %s145, 16, %s148, %s138
        $region20: #{tpu_custom_call.1} parent=15 // pred_fallthru
          _
        // Predicated region
        $region21: #{tpu_custom_call.1} parent=15 // pred_check
          %p151 = pneg %p81
        $region22: #{tpu_custom_call.1} parent=15 // pred_check_branch
          %153 = sbr.rel (%p151) target = $region24
        $region23: #{tpu_custom_call.1} parent=15 // pred_region
          %s154 = sand.u32 %s71, 1
          %s155 = scalar_lea.sflag [#allocation7], %s154
          %s156 = sand.u32 %s71, 1
          %s157 = smul.addr %s156, 16
          %s158 = scalar_lea.vmem [#allocation6], %s157
          %p159 = scmp.lt.s32.totalorder %s24, 2
          %s160 = scalar_select %p159, %s24, 2
          %s161 = smul.u32 2, %s25
          %s163 = ssub.s32 256, 256
          %164 = vsyncadd %s155, %s163
          %s165 = smul.addr %s160, 2
          %s166 = sadd.s32 %s161, %s165
          %s167 = smul.addr %s166, 128
          %s168 = scalar_lea.hbm %s1, %s167
          %s169 = sshll.u32 %s158, 4
          %s170 = int_to_ptr.vmem [resolvable:$true] %s169
          %175 = dma.hbm_to_vmem [thread:$0]  %s168, 256, %s170, %s155, 128, 128, 8
        $region24: #{tpu_custom_call.1} parent=15 // pred_fallthru
          _
      $region16: #{tpu_custom_call.1} parent=5 // pred_fallthru
        _
      %p176 = scmp.le.s32.totalorder 1, %s17
      %p177 = scmp.lt.s32.totalorder %s17, 9
      %p178 = pnand %p176, %p177
      %p179 = pneg %p178
      // Predicated region
      $region25: #{tpu_custom_call.1} parent=5 // pred_check
        _
      $region26: #{tpu_custom_call.1} parent=5 // pred_check_branch
        %181 = sbr.rel (%p178) target = $region28
      $region27: #{tpu_custom_call.1} parent=5 // pred_region
        %s182 = ssub.s32 %s17, 1
        %s183 = sand.u32 %s42, 1
        %s184 = scalar_lea.sflag [#allocation4], %s183
        %s185 = sand.u32 %s42, 1
        %s186 = scalar_lea.vmem [#allocation3], %s185
        // Predicated region
        $region29: #{tpu_custom_call.1} parent=27 // pred_check
          %p187 = pneg %p55
        $region30: #{tpu_custom_call.1} parent=27 // pred_check_branch
          %189 = sbr.rel (%p187) target = $region32
        $region31: #{tpu_custom_call.1} parent=27 // pred_region
          %190 = dma.done %s184, 16
        $region32: #{tpu_custom_call.1} parent=27 // pred_fallthru
          _
        %s191 = sand.u32 %s74, 1
        %s192 = scalar_lea.sflag [#allocation7], %s191
        %s193 = sand.u32 %s74, 1
        %s194 = smul.addr %s193, 16
        %s195 = scalar_lea.vmem [#allocation6], %s194
        // Predicated region
        $region33: #{tpu_custom_call.1} parent=27 // pred_check
          %p196 = pneg %p87
        $region34: #{tpu_custom_call.1} parent=27 // pred_check_branch
          %198 = sbr.rel (%p196) target = $region36
        $region35: #{tpu_custom_call.1} parent=27 // pred_region
          %199 = dma.done %s192, 256
        $region36: #{tpu_custom_call.1} parent=27 // pred_fallthru
          _
        %s200 = sand.u32 %s42, 1
        %s201 = scalar_lea.sflag [#allocation4], %s200
        %s202 = sand.u32 %s42, 1
        %s203 = scalar_lea.vmem [#allocation3], %s202
        %p204 = pneg %p55
        %p205 = pneg %p52
        %s206 = sand.u32 %s74, 1
        %s207 = scalar_lea.sflag [#allocation7], %s206
        %s208 = sand.u32 %s74, 1
        %s209 = smul.addr %s208, 16
        %s210 = scalar_lea.vmem [#allocation6], %s209
        %p211 = pneg %p87
        %p212 = pneg %p84
        %p213 = pneg %p115
        %p214 = pneg %p112
        %s215 = sand.u32 %s102, 1
        %s216 = scalar_lea.sflag [#allocation5], %s215
        %s217 = sand.u32 %s102, 1
        %s218 = smul.addr %s217, 16
        %s219 = scalar_lea.vmem [#allocation8], %s218
        %p220 = scmp.lt.s32.totalorder %s26, 2
        %s221 = scalar_select %p220, %s26, 2
        %s222 = smul.u32 2, %s27
        %s223 = smul.u32 2, %s27
        %p224 = scmp.eq.s32.totalorder %s27, 0
        // Predicated region
        $region37: #{tpu_custom_call.1} parent=27 // pred_check
          %p225 = pneg %p224
        $region38: #{tpu_custom_call.1} parent=27 // pred_check_branch
          %227 = sbr.rel (%p225) target = $region40
        $region39: #{tpu_custom_call.1} parent=27 // pred_region
          %v228 = vlaneseq
          %v229 = vshrl.u32 %v228, 7
          %v230 = vadd.s32 %v229, 8
          %v231 = vadd.s32 %v229, 16
          %v232 = vld [vmem:[%s186] sm:$0x1]
          %v233 = vlaneseq
          %v234 = vshrl.u32 %v233, 7
          %v235 = vsub.s32 0, %v234
          %v236 = vrot.slane %v232, %v235
          %vm237 = vcmp.eq.s32.totalorder %v229, %v236
          %vm238 = vcmp.eq.s32.totalorder %v230, %v236
          %vm239 = vcmp.eq.s32.totalorder %v231, %v236
          %v240 = vsel %vm237, 1, 0
          %v241 = vsel %vm238, 1, 0
          %v242 = vsel %vm239, 1, 0
          %v243 = vcvt.s32.f32 %v240
          %v244 = vcvt.s32.f32 %v241
          %v245 = vcvt.s32.f32 %v242
          %246 = vst [vmem:[#allocation2] sm:$0xff] %v243
          %247 = vst [vmem:[#allocation2 + $0x8] sm:$0xff] %v244
          %248 = vst [vmem:[#allocation2 + $0x10] sm:$0xf] %v245
        $region40: #{tpu_custom_call.1} parent=27 // pred_fallthru
          _
        %v249 = vld [vmem:[%s195] sm:$0xff]
        %v250 = vld [vmem:[%s195 + $0x8] sm:$0xff]
        %vm251 = vcmask 162816
        %v252 = vsel %vm251, %v249, -inf
        %253 = vmax.xlane.f32.xlu0 %v252
        %v254 = vpop.xlane.xlu0 %253
        %v255 = vsel %vm251, %v250, -inf
        %256 = vmax.xlane.f32.xlu0 %v255
        %v257 = vpop.xlane.xlu0 %256
        %v258 = vsub.f32 %v249, %v254
        %v259 = vsub.f32 %v250, %v257
        %v260 = vmul.f32 %v258, 1.442695
        %v261 = vpow.pop %v260
        %v262 = vmul.f32 %v259, 1.442695
        %v263 = vpow.pop %v262
        %v264 = vsel %vm251, %v261, 0.0
        %265 = vadd.xlane.f32.xlu0 %v264
        %v266 = vpop.xlane.xlu0 %265
        %v267 = vsel %vm251, %v263, 0.0
        %268 = vadd.xlane.f32.xlu0 %v267
        %v269 = vpop.xlane.xlu0 %268
        %v270 = vlog2.pop %v266
        %v271 = vmul.f32 %v270, 0.6931472
        %v272 = vlog2.pop %v269
        %v273 = vmul.f32 %v272, 0.6931472
        %v274 = vadd.f32 %v254, %v271
        %v275 = vadd.f32 %v257, %v273
        %v276 = vld [vmem:[#allocation2] sm:$0xff]
        %v277 = vld [vmem:[#allocation2 + $0x8] sm:$0xff]
        %v278 = vld [vmem:[#allocation2 + $0x10] sm:$0xf]
        %v280 = vsel %vm251, %v249, 0
        %v283 = vsel %vm251, %v250, 0
        %vm285 = vcmask 1043456
        %v287 = vsel %vm285, %v278, 0
        %289 = vmatprep.subr.mxu0 0.0
        %290 = vmatpush1.msra.mxu0 0.0
        %291 = vmatprep.subr.mxu0 0.0
        %292 = vmatpush1.msra.mxu0 0.0
        %293 = vmatprep.subr.mxu0 0.0
        %294 = vmatpush1.msra.mxu0 0.0
        %295 = vmatprep.subr.mxu0 0.0
        %296 = vmatpush1.msra.mxu0 0.0
        %297 = vmatprep.subr.mxu0 0.0
        %298 = vmatpush1.msra.mxu0 0.0
        %299 = vmatprep.subr.mxu0 0.0
        %300 = vmatpush1.msra.mxu0 0.0
        %301 = vmatprep.subr.mxu0 0.0
        %302 = vmatpush1.msra.mxu0 0.0
        %303 = vmatprep.subr.mxu0 0.0
        %304 = vmatpush1.msra.mxu0 0.0
        %305 = vmatprep.subr.mxu0 0.0
        %306 = vmatpush1.msra.mxu0 0.0
        %307 = vmatprep.subr.mxu0 0.0
        %308 = vmatpush1.msra.mxu0 0.0
        %309 = vmatprep.subr.mxu0 0.0
        %310 = vmatpush1.msra.mxu0 0.0
        %311 = vmatprep.subr.mxu0 0.0
        %312 = vmatpush1.msra.mxu0 0.0
        %313 = vmatprep.subr.mxu0 0.0
        %314 = vmatpush1.msra.mxu0 0.0
        %315 = vmatprep.subr.mxu0 0.0
        %316 = vmatpush1.msra.mxu0 %v287
        %317 = vmatprep.subr.mxu0 0.0
        %318 = vmatpush1.msra.mxu0 %v277
        %319 = vmatprep.subr.mxu0 0.0
        %320 = vmatpush1.msra.mxu0 %v276
        %321 = vmatprep.subr.mxu0 0.0
        %322 = vmatpush2.msra.mxu0 0.0
        %323 = vmatprep.subr.mxu0 0.0
        %324 = vmatpush2.msra.mxu0 0.0
        %325 = vmatprep.subr.mxu0 0.0
        %326 = vmatpush2.msra.mxu0 0.0
        %327 = vmatprep.subr.mxu0 0.0
        %328 = vmatpush2.msra.mxu0 0.0
        %329 = vmatprep.subr.mxu0 0.0
        %330 = vmatpush2.msra.mxu0 0.0
        %331 = vmatprep.subr.mxu0 0.0
        %332 = vmatpush2.msra.mxu0 0.0
        %333 = vmatprep.subr.mxu0 0.0
        %334 = vmatpush2.msra.mxu0 0.0
        %335 = vmatprep.subr.mxu0 0.0
        %336 = vmatpush2.msra.mxu0 0.0
        %337 = vmatprep.subr.mxu0 0.0
        %338 = vmatpush2.msra.mxu0 0.0
        %339 = vmatprep.subr.mxu0 0.0
        %340 = vmatpush2.msra.mxu0 0.0
        %341 = vmatprep.subr.mxu0 0.0
        %342 = vmatpush2.msra.mxu0 0.0
        %343 = vmatprep.subr.mxu0 0.0
        %344 = vmatpush2.msra.mxu0 0.0
        %345 = vmatprep.subr.mxu0 0.0
        %346 = vmatpush2.msra.mxu0 0.0
        %347 = vmatprep.subr.mxu0 0.0
        %348 = vmatpush2.msra.mxu0 0.0
        %349 = vmatprep.subr.mxu0 0.0
        %350 = vmatpush2.msra.mxu0 0.0
        %351 = vmatprep.subr.mxu0 0.0
        %352 = vmatpush2.msra.mxu0 0.0
        %353 = vmatprep.mubr.f32.mxu0 0.0
        %354 = vmatmul.mubr.f32.gmra.mxu0 %v280
        %v355 = vpop.f32.mrf.mxu0
        %v356 = vadd.f32 0.0, %v355
        %v357 = vpop.f32.mrf.mxu0
        %358 = vmatprep.mubr.f32.mxu0 0.0
        %359 = vmatmul.mubr.f32.gmra.mxu0 %v283
        %v360 = vpop.f32.mrf.mxu0
        %v361 = vadd.f32 0.0, %v360
        %v362 = vpop.f32.mrf.mxu0
        %363 = vdwg.mxu0
        %v364 = vsub.f32 %v356, %v274
        %v365 = vsub.f32 %v361, %v275
        %366 = vst [vmem:[%s219] sm:$0xff] %v364
        %367 = vst [vmem:[%s219 + $0x8] sm:$0xff] %v365
        %s368 = sand.u32 %s102, 1
        %s369 = scalar_lea.sflag [#allocation5], %s368
        %s370 = sand.u32 %s102, 1
        %s371 = smul.addr %s370, 16
        %s372 = scalar_lea.vmem [#allocation8], %s371
        // Predicated region
        $region41: #{tpu_custom_call.1} parent=27 // pred_check
          %p373 = pneg %p112
        $region42: #{tpu_custom_call.1} parent=27 // pred_check_branch
          %375 = sbr.rel (%p373) target = $region44
        $region43: #{tpu_custom_call.1} parent=27 // pred_region
          %s376 = smul.u32 2, %s27
          %s378 = ssub.s32 256, 256
          %379 = vsyncadd %s369, %s378
          %s380 = smul.addr %s26, 2
          %s381 = sadd.s32 %s376, %s380
          %s382 = smul.addr %s381, 128
          %s383 = scalar_lea.hbm %s2, %s382
          %s384 = sshll.u32 %s372, 4
          %s385 = int_to_ptr.vmem [resolvable:$true] %s384
          %390 = dma.vmem_to_hbm [thread:$0]  %s385, 256, %s383, %s369, 128, 128, 8
        $region44: #{tpu_custom_call.1} parent=27 // pred_fallthru
          _
      $region28: #{tpu_custom_call.1} parent=5 // pred_fallthru
        _
      %p391 = scmp.le.s32.totalorder 2, %s17
      // Predicated region
      $region45: #{tpu_custom_call.1} parent=5 // pred_check
        %p392 = pneg %p391
      $region46: #{tpu_custom_call.1} parent=5 // pred_check_branch
        %394 = sbr.rel (%p392) target = $region48
      $region47: #{tpu_custom_call.1} parent=5 // pred_region
        %s395 = ssub.s32 %s17, 2
        // Predicated region
        $region49: #{tpu_custom_call.1} parent=47 // pred_check
          %p396 = pneg %p118
        $region50: #{tpu_custom_call.1} parent=47 // pred_check_branch
          %398 = sbr.rel (%p396) target = $region52
        $region51: #{tpu_custom_call.1} parent=47 // pred_region
          %s399 = sand.u32 %s103, 1
          %s400 = scalar_lea.sflag [#allocation5], %s399
          %s401 = sand.u32 %s103, 1
          %s402 = smul.addr %s401, 16
          %s403 = scalar_lea.vmem [#allocation8], %s402
          %404 = dma.done %s400, 256
        $region52: #{tpu_custom_call.1} parent=47 // pred_fallthru
          _
      $region48: #{tpu_custom_call.1} parent=5 // pred_fallthru
        _
    $region6: #{tpu_custom_call.1} parent=1 // loop_footer
      %s21 = sadd.s32 1, %s17
    $region7: #{tpu_custom_call.1} parent=1 // loop_footer_branch
      %16 = sbr.rel target = $region3
    $region8: #{tpu_custom_call.1} parent=1 // loop_exit
      _
    %405 = vsyncpa [#allocation4], 1
    %s406 = scalar_lea.sflag [#allocation4], 1
    %407 = vsyncpa %s406, 1
    %408 = vsyncpa [#allocation7], 1
    %s409 = scalar_lea.sflag [#allocation7], 1
    %410 = vsyncpa %s409, 1
    %411 = vsyncpa [#allocation5], 1
    %s412 = scalar_lea.sflag [#allocation5], 1
    %413 = vsyncpa %s412, 1

</llo_original>
